<compile_context>
chip_gen: v6e
topology: v6e:2x2x1
jax: 0.10.0
libtpu: 0.0.40
codegen_flags: <defaults>
</compile_context>

<pallas_src>
import jax
import jax.numpy as jnp
from jax.experimental import pallas as pl
from jax.experimental.pallas import tpu as pltpu

C_HIDDEN = 128   # OpenFold AngleResnet hidden size (c_resnet); lane-dense on TPU.


def _angle_resnet_block_kernel(a_ref, w1_ref, b1_ref, w2_ref, b2_ref, o_ref):
    # a_ref: (tile, C) rows; w*: (C, C) pre-transposed [in, out]; b*: (1, C).
    a = a_ref[...].astype(jnp.float32)           # residual kept in f32
    h = jnp.maximum(a, 0.0)                                              # relu
    h = jnp.dot(h, w1_ref[...], preferred_element_type=jnp.float32) + b1_ref[...]
    h = jnp.maximum(h, 0.0)                                              # relu
    h = jnp.dot(h, w2_ref[...], preferred_element_type=jnp.float32) + b2_ref[...]
    o_ref[...] = (h + a).astype(o_ref.dtype)                             # residual add


def angle_resnet_block(a, params, *, tm=2048):
    """a: [..., c_hidden]. params: (w1, b1, w2, b2) with w* as [in, out], b* as [1, c]."""
    w1, b1, w2, b2 = params
    orig_shape = a.shape
    c = orig_shape[-1]
    assert w1.shape == (c, c) and w2.shape == (c, c)
    assert b1.shape == (1, c) and b2.shape == (1, c)

    a2 = a.reshape(-1, c)
    m = a2.shape[0]

    # Row tile: single grid step when m is small, else `tm` rows; always a
    # multiple of 8 (sublane) so the BlockSpec obeys the (8, 128) rule.
    tile = int(min(tm, m))
    tile = max(8, ((tile + 7) // 8) * 8)
    grid = pl.cdiv(m, tile)
    m_pad = grid * tile
    if m_pad != m:
        a2 = jnp.pad(a2, ((0, m_pad - m), (0, 0)))

    # Constant (grid-invariant) blocks: single-buffered so they don't waste
    # VMEM on a second pipeline buffer that never gets used.
    w_spec = pl.BlockSpec((c, c), lambda i: (0, 0), pipeline_mode=pl.Buffered(1))
    b_spec = pl.BlockSpec((1, c), lambda i: (0, 0), pipeline_mode=pl.Buffered(1))

    flops = 2 * 2 * m_pad * c * c                       # two (m, c) x (c, c) matmuls
    bytes_acc = (2 * m_pad * c + 2 * c * c + 2 * c) * a.dtype.itemsize

    out = pl.pallas_call(
        _angle_resnet_block_kernel,
        out_shape=jax.ShapeDtypeStruct((m_pad, c), a.dtype),
        grid_spec=pltpu.PrefetchScalarGridSpec(
            num_scalar_prefetch=0,
            grid=(grid,),
            in_specs=[
                pl.BlockSpec((tile, c), lambda i: (i, 0)),   # activation rows
                w_spec,                                      # W1 (resident)
                b_spec,                                      # b1
                w_spec,                                      # W2 (resident)
                b_spec,                                      # b2
            ],
            out_specs=pl.BlockSpec((tile, c), lambda i: (i, 0)),
        ),
        compiler_params=pltpu.CompilerParams(
            dimension_semantics=("parallel",),
        ),
        cost_estimate=pl.CostEstimate(
            flops=flops, transcendentals=0, bytes_accessed=bytes_acc),
    )(a2, w1, b1, w2, b2)

    if m_pad != m:
        out = out[:m]
    return out.reshape(orig_shape)


def init_params(key, c=C_HIDDEN):
    """Deterministic synthetic parameters.

    OpenFold's 'relu' init is He-normal; 'final' init is zeros.  Small random
    values are used for linear_2 so the full compute path is exercised
    (zeros would collapse the block to an identity residual).
    """
    ks = jax.random.split(key, 4)
    he = (2.0 / c) ** 0.5
    w1 = jax.random.normal(ks[0], (c, c), jnp.float32) * he       # init='relu'
    w2 = jax.random.normal(ks[1], (c, c), jnp.float32) * 0.02     # init='final' (non-zero)
    b1 = jax.random.normal(ks[2], (1, c), jnp.float32) * 0.01
    b2 = jax.random.normal(ks[3], (1, c), jnp.float32) * 0.01
    return (w1, b1, w2, b2)


def reference(a, params):
    """Pure-JAX reference mirroring the PyTorch AngleResnetBlock.forward."""
    w1, b1, w2, b2 = params
    s_initial = a
    a = jax.nn.relu(a)
    a = a @ w1 + b1[0]
    a = jax.nn.relu(a)
    a = a @ w2 + b2[0]
    return a + s_initial


if __name__ == "__main__":
    key = jax.random.PRNGKey(0)
    k_a, k_p = jax.random.split(key)
    batch, n_res = 2, 9          # m = 18 rows -> exercises the padded-last-tile path
    a = jax.random.normal(k_a, (batch, n_res, C_HIDDEN), jnp.float32)
    params = init_params(k_p)

    out = angle_resnet_block(a, params)
    out = jax.block_until_ready(out)

    ref = reference(a, params)
    assert out.shape == a.shape
    assert jnp.allclose(out, ref, atol=1e-3, rtol=1e-3), "mismatch vs reference"
    print("KERNEL_OK")
</pallas_src>

<mosaic_0001>
module attributes {stable_mosaic.version = 11 : i64} {
  func.func @_angle_resnet_block_kernel(%arg0: i32, %arg1: memref<24x128xf32, #tpu.memory_space<vmem>>, %arg2: memref<128x128xf32, #tpu.memory_space<vmem>>, %arg3: memref<1x128xf32, #tpu.memory_space<vmem>>, %arg4: memref<128x128xf32, #tpu.memory_space<vmem>>, %arg5: memref<1x128xf32, #tpu.memory_space<vmem>>, %arg6: memref<24x128xf32, #tpu.memory_space<vmem>>) attributes {dimension_semantics = [#tpu.dimension_semantics<parallel>], iteration_bounds = array<i64: 1>, scalar_prefetch = 0 : i64, scratch_operands = 0 : i64, tpu.core_type = #tpu.core_type<tc>, window_params = [{transform_indices = @transform_0, window_bounds = array<i64: 24, 128>}, {pipeline_mode = #tpu.pipeline_mode<synchronous>, transform_indices = @transform_1, window_bounds = array<i64: 128, 128>}, {pipeline_mode = #tpu.pipeline_mode<synchronous>, transform_indices = @transform_2, window_bounds = array<i64: 1, 128>}, {pipeline_mode = #tpu.pipeline_mode<synchronous>, transform_indices = @transform_3, window_bounds = array<i64: 128, 128>}, {pipeline_mode = #tpu.pipeline_mode<synchronous>, transform_indices = @transform_4, window_bounds = array<i64: 1, 128>}, {transform_indices = @transform_5, window_bounds = array<i64: 24, 128>}]} {
    %c0 = arith.constant 0 : index
    %c0_0 = arith.constant 0 : index
    %0 = vector.load %arg1[%c0, %c0_0] : memref<24x128xf32, #tpu.memory_space<vmem>>, vector<24x128xf32>
    %cst = arith.constant 0.000000e+00 : f32
    %1 = vector.broadcast %cst : f32 to vector<24x128xf32>
    %2 = arith.maximumf %0, %1 : vector<24x128xf32>
    %c0_1 = arith.constant 0 : index
    %c0_2 = arith.constant 0 : index
    %3 = vector.load %arg2[%c0_1, %c0_2] : memref<128x128xf32, #tpu.memory_space<vmem>>, vector<128x128xf32>
    %cst_3 = arith.constant dense<0.000000e+00> : vector<24x128xf32>
    %4 = tpu.matmul %2, %3, %cst_3 {dimension_numbers = #tpu.dot_dimension_numbers<[1], [0], [0], [1], [0, 0, 1, 1], [], []>} : vector<24x128xf32>, vector<128x128xf32>, vector<24x128xf32> -> vector<24x128xf32>
    %c0_4 = arith.constant 0 : index
    %c0_5 = arith.constant 0 : index
    %5 = vector.load %arg3[%c0_4, %c0_5] : memref<1x128xf32, #tpu.memory_space<vmem>>, vector<1x128xf32>
    %6 = vector.broadcast %5 : vector<1x128xf32> to vector<24x128xf32>
    %7 = arith.addf %4, %6 : vector<24x128xf32>
    %cst_6 = arith.constant 0.000000e+00 : f32
    %8 = vector.broadcast %cst_6 : f32 to vector<24x128xf32>
    %9 = arith.maximumf %7, %8 : vector<24x128xf32>
    %c0_7 = arith.constant 0 : index
    %c0_8 = arith.constant 0 : index
    %10 = vector.load %arg4[%c0_7, %c0_8] : memref<128x128xf32, #tpu.memory_space<vmem>>, vector<128x128xf32>
    %cst_9 = arith.constant dense<0.000000e+00> : vector<24x128xf32>
    %11 = tpu.matmul %9, %10, %cst_9 {dimension_numbers = #tpu.dot_dimension_numbers<[1], [0], [0], [1], [0, 0, 1, 1], [], []>} : vector<24x128xf32>, vector<128x128xf32>, vector<24x128xf32> -> vector<24x128xf32>
    %c0_10 = arith.constant 0 : index
    %c0_11 = arith.constant 0 : index
    %12 = vector.load %arg5[%c0_10, %c0_11] : memref<1x128xf32, #tpu.memory_space<vmem>>, vector<1x128xf32>
    %13 = vector.broadcast %12 : vector<1x128xf32> to vector<24x128xf32>
    %14 = arith.addf %11, %13 : vector<24x128xf32>
    %15 = arith.addf %14, %0 : vector<24x128xf32>
    %c0_12 = arith.constant 0 : index
    %c0_13 = arith.constant 0 : index
    %16 = vector.load %arg6[%c0_12, %c0_13] : memref<24x128xf32, #tpu.memory_space<vmem>>, vector<24x128xf32>
    tpu.vector_store %arg6[%c0_12, %c0_13], %15 {strides = array<i32>} : memref<24x128xf32, #tpu.memory_space<vmem>>, vector<24x128xf32>,
    return
  }
  func.func @transform_0(%arg0: i32) -> (i32, i32) {
    %c0_i32 = arith.constant 0 : i32
    %c0_i32_0 = arith.constant 0 : i32
    return %arg0, %c0_i32 : i32, i32
  }
  func.func @transform_1(%arg0: i32) -> (i32, i32) {
    %c0_i32 = arith.constant 0 : i32
    %c0_i32_0 = arith.constant 0 : i32
    %c0_i32_1 = arith.constant 0 : i32
    return %c0_i32, %c0_i32_0 : i32, i32
  }
  func.func @transform_2(%arg0: i32) -> (i32, i32) {
    %c0_i32 = arith.constant 0 : i32
    %c0_i32_0 = arith.constant 0 : i32
    %c0_i32_1 = arith.constant 0 : i32
    return %c0_i32, %c0_i32_0 : i32, i32
  }
  func.func @transform_3(%arg0: i32) -> (i32, i32) {
    %c0_i32 = arith.constant 0 : i32
    %c0_i32_0 = arith.constant 0 : i32
    %c0_i32_1 = arith.constant 0 : i32
    return %c0_i32, %c0_i32_0 : i32, i32
  }
  func.func @transform_4(%arg0: i32) -> (i32, i32) {
    %c0_i32 = arith.constant 0 : i32
    %c0_i32_0 = arith.constant 0 : i32
    %c0_i32_1 = arith.constant 0 : i32
    return %c0_i32, %c0_i32_0 : i32, i32
  }
  func.func @transform_5(%arg0: i32) -> (i32, i32) {
    %c0_i32 = arith.constant 0 : i32
    %c0_i32_0 = arith.constant 0 : i32
    return %arg0, %c0_i32 : i32, i32
  }
}

</mosaic_0001>

<llo_original>
// kernel: tpu_custom_call.1
$region0: #{tpu_custom_call.1}
  #allocation0 [shape = 'u32[]', space=smem, size = 0x4, offset = 0x4, fixed_abs, tag = 'smem constant byte address 0x4 - core index']
  #allocation1 [shape = 'u32[144,128]{1,0:T(1,128)}', space=vmem, size = 0x12000, scoped, tag = 'internal scratch']
  %s0 = inlined_call_operand.hbm [shape: f32[24,128], index: 0, kind: input, shape index: {}]
  %s1 = inlined_call_operand.hbm [shape: f32[128,128], index: 1, kind: input, shape index: {}]
  %s2 = inlined_call_operand.vmem [shape: f32[1,128], index: 2, kind: input, shape index: {}]
  %s3 = inlined_call_operand.hbm [shape: f32[128,128], index: 3, kind: input, shape index: {}]
  %s4 = inlined_call_operand.vmem [shape: f32[1,128], index: 4, kind: input, shape index: {}]
  %s5 = inlined_call_operand.hbm [shape: f32[24,128], index: 5, kind: output, shape index: {}]
  %s6 = sld [smem:[#allocation0]]
  $region42: #{tpu_custom_call.1} parent=0
    _
  %s8 = ssub.s32 1, %s6
  %s9 = scalar_select 0, %s8, %s6
  $region1: #{tpu_custom_call.1} parent=0
    #allocation2 [shape = 'u8[12288]{0}', space=vmem, size = 0x3000, scoped, tag = 'input window, operand 0, single buffered']
    #allocation3 [shape = 's32[1]{0}', space=sflag, size = 0x4, scoped, tag = 'scoped memory for tpu_custom_call.1']
    #allocation4 [shape = 's32[1]{0}', space=sflag, size = 0x4, scoped, tag = 'scoped memory for tpu_custom_call.1']
    #allocation5 [shape = 'u8[65536]{0}', space=vmem, size = 0x10000, scoped, tag = 'input window, operand 1, single buffered']
    #allocation6 [shape = 's32[1]{0}', space=sflag, size = 0x4, scoped, tag = 'scoped memory for tpu_custom_call.1']
    #allocation7 [shape = 'u8[65536]{0}', space=vmem, size = 0x10000, scoped, tag = 'input window, operand 3, single buffered']
    #allocation8 [shape = 'u8[12288]{0}', space=vmem, size = 0x3000, scoped, tag = 'output window, operand 0, single buffered']
    %10 = vsyncpa [#allocation3], 0
    %11 = vsyncpa [#allocation6], 0
    %12 = vsyncpa [#allocation4], 0
    // Predicated region
    $region2: #{tpu_custom_call.1} parent=1 // pred_check
      _
    $region3: #{tpu_custom_call.1} parent=1 // pred_check_branch
      %14 = sbr.rel (0) target = $region5
    $region4: #{tpu_custom_call.1} parent=1 // pred_region
      %s16 = ssub.s32 384, 384
      %17 = vsyncadd [#allocation3], %s16
      %s18 = sshll.u32 [#allocation2], 4
      %s19 = int_to_ptr.vmem [resolvable:$true] %s18
      %24 = dma.hbm_to_vmem [thread:$0]  %s0, 384, %s19, [#allocation3], 128, 128, 8
    $region5: #{tpu_custom_call.1} parent=1 // pred_fallthru
      _
    // Predicated region
    $region6: #{tpu_custom_call.1} parent=1 // pred_check
      _
    $region7: #{tpu_custom_call.1} parent=1 // pred_check_branch
      %26 = sbr.rel (0) target = $region9
    $region8: #{tpu_custom_call.1} parent=1 // pred_region
      %s28 = ssub.s32 2048, 2048
      %29 = vsyncadd [#allocation6], %s28
      %s30 = sshll.u32 [#allocation5], 4
      %s31 = int_to_ptr.vmem [resolvable:$true] %s30
      %36 = dma.hbm_to_vmem [thread:$0]  %s1, 2048, %s31, [#allocation6], 128, 128, 8
    $region9: #{tpu_custom_call.1} parent=1 // pred_fallthru
      _
    // Predicated region
    $region10: #{tpu_custom_call.1} parent=1 // pred_check
      _
    $region11: #{tpu_custom_call.1} parent=1 // pred_check_branch
      %38 = sbr.rel (0) target = $region13
    $region12: #{tpu_custom_call.1} parent=1 // pred_region
      _
    $region13: #{tpu_custom_call.1} parent=1 // pred_fallthru
      _
    // Predicated region
    $region14: #{tpu_custom_call.1} parent=1 // pred_check
      _
    $region15: #{tpu_custom_call.1} parent=1 // pred_check_branch
      %40 = sbr.rel (0) target = $region17
    $region16: #{tpu_custom_call.1} parent=1 // pred_region
      %s42 = ssub.s32 2048, 2048
      %43 = vsyncadd [#allocation6], %s42
      %s44 = sshll.u32 [#allocation7], 4
      %s45 = int_to_ptr.vmem [resolvable:$true] %s44
      %50 = dma.hbm_to_vmem [thread:$0]  %s3, 2048, %s45, [#allocation6], 128, 128, 8
    $region17: #{tpu_custom_call.1} parent=1 // pred_fallthru
      _
    // Predicated region
    $region18: #{tpu_custom_call.1} parent=1 // pred_check
      _
    $region19: #{tpu_custom_call.1} parent=1 // pred_check_branch
      %52 = sbr.rel (0) target = $region21
    $region20: #{tpu_custom_call.1} parent=1 // pred_region
      _
    $region21: #{tpu_custom_call.1} parent=1 // pred_fallthru
      _
    // Predicated region
    $region22: #{tpu_custom_call.1} parent=1 // pred_check
      _
    $region23: #{tpu_custom_call.1} parent=1 // pred_check_branch
      %54 = sbr.rel (0) target = $region25
    $region24: #{tpu_custom_call.1} parent=1 // pred_region
      %55 = dma.done [#allocation3], 384
    $region25: #{tpu_custom_call.1} parent=1 // pred_fallthru
      _
    // Predicated region
    $region26: #{tpu_custom_call.1} parent=1 // pred_check
      _
    $region27: #{tpu_custom_call.1} parent=1 // pred_check_branch
      %57 = sbr.rel (0) target = $region29
    $region28: #{tpu_custom_call.1} parent=1 // pred_region
      %58 = dma.done [#allocation6], 2048
    $region29: #{tpu_custom_call.1} parent=1 // pred_fallthru
      _
    // Predicated region
    $region30: #{tpu_custom_call.1} parent=1 // pred_check
      _
    $region31: #{tpu_custom_call.1} parent=1 // pred_check_branch
      %60 = sbr.rel (0) target = $region33
    $region32: #{tpu_custom_call.1} parent=1 // pred_region
      %61 = dma.done [#allocation6], 2048
    $region33: #{tpu_custom_call.1} parent=1 // pred_fallthru
      _
    %v62 = vld [vmem:[#allocation2] sm:$0xff]
    %v63 = vld [vmem:[#allocation2 + $0x8] sm:$0xff]
    %v64 = vld [vmem:[#allocation2 + $0x10] sm:$0xff]
    %v65 = vmax.f32 %v62, 0.0
    %v66 = vmax.f32 %v63, 0.0
    %v67 = vmax.f32 %v64, 0.0
    %v68 = vld [vmem:[#allocation5] sm:$0xff]
    %v69 = vld [vmem:[#allocation5 + $0x8] sm:$0xff]
    %v70 = vld [vmem:[#allocation5 + $0x10] sm:$0xff]
    %v71 = vld [vmem:[#allocation5 + $0x18] sm:$0xff]
    %v72 = vld [vmem:[#allocation5 + $0x20] sm:$0xff]
    %v73 = vld [vmem:[#allocation5 + $0x28] sm:$0xff]
    %v74 = vld [vmem:[#allocation5 + $0x30] sm:$0xff]
    %v75 = vld [vmem:[#allocation5 + $0x38] sm:$0xff]
    %v76 = vld [vmem:[#allocation5 + $0x40] sm:$0xff]
    %v77 = vld [vmem:[#allocation5 + $0x48] sm:$0xff]
    %v78 = vld [vmem:[#allocation5 + $0x50] sm:$0xff]
    %v79 = vld [vmem:[#allocation5 + $0x58] sm:$0xff]
    %v80 = vld [vmem:[#allocation5 + $0x60] sm:$0xff]
    %v81 = vld [vmem:[#allocation5 + $0x68] sm:$0xff]
    %v82 = vld [vmem:[#allocation5 + $0x70] sm:$0xff]
    %v83 = vld [vmem:[#allocation5 + $0x78] sm:$0xff]
    %v84 = vld [vmem:[%s2] sm:$0x1]
    %v86 = vlaneseq
    %v87 = vshrl.u32 %v86, 7
    %v88 = vsub.s32 0, %v87
    %v89 = vrot.slane %v84, %v88
    %91 = vmatprep.subr.mxu0 0.0
    %92 = vmatpush1.msra.mxu0 %v83
    %93 = vmatprep.subr.mxu0 0.0
    %94 = vmatpush1.msra.mxu0 %v82
    %95 = vmatprep.subr.mxu0 0.0
    %96 = vmatpush1.msra.mxu0 %v81
    %97 = vmatprep.subr.mxu0 0.0
    %98 = vmatpush1.msra.mxu0 %v80
    %99 = vmatprep.subr.mxu0 0.0
    %100 = vmatpush1.msra.mxu0 %v79
    %101 = vmatprep.subr.mxu0 0.0
    %102 = vmatpush1.msra.mxu0 %v78
    %103 = vmatprep.subr.mxu0 0.0
    %104 = vmatpush1.msra.mxu0 %v77
    %105 = vmatprep.subr.mxu0 0.0
    %106 = vmatpush1.msra.mxu0 %v76
    %107 = vmatprep.subr.mxu0 0.0
    %108 = vmatpush1.msra.mxu0 %v75
    %109 = vmatprep.subr.mxu0 0.0
    %110 = vmatpush1.msra.mxu0 %v74
    %111 = vmatprep.subr.mxu0 0.0
    %112 = vmatpush1.msra.mxu0 %v73
    %113 = vmatprep.subr.mxu0 0.0
    %114 = vmatpush1.msra.mxu0 %v72
    %115 = vmatprep.subr.mxu0 0.0
    %116 = vmatpush1.msra.mxu0 %v71
    %117 = vmatprep.subr.mxu0 0.0
    %118 = vmatpush1.msra.mxu0 %v70
    %119 = vmatprep.subr.mxu0 0.0
    %120 = vmatpush1.msra.mxu0 %v69
    %121 = vmatprep.subr.mxu0 0.0
    %122 = vmatpush1.msra.mxu0 %v68
    %123 = vmatprep.subr.mxu0 0.0
    %124 = vmatpush2.msra.mxu0 0.0
    %125 = vmatprep.subr.mxu0 0.0
    %126 = vmatpush2.msra.mxu0 0.0
    %127 = vmatprep.subr.mxu0 0.0
    %128 = vmatpush2.msra.mxu0 0.0
    %129 = vmatprep.subr.mxu0 0.0
    %130 = vmatpush2.msra.mxu0 0.0
    %131 = vmatprep.subr.mxu0 0.0
    %132 = vmatpush2.msra.mxu0 0.0
    %133 = vmatprep.subr.mxu0 0.0
    %134 = vmatpush2.msra.mxu0 0.0
    %135 = vmatprep.subr.mxu0 0.0
    %136 = vmatpush2.msra.mxu0 0.0
    %137 = vmatprep.subr.mxu0 0.0
    %138 = vmatpush2.msra.mxu0 0.0
    %139 = vmatprep.subr.mxu0 0.0
    %140 = vmatpush2.msra.mxu0 0.0
    %141 = vmatprep.subr.mxu0 0.0
    %142 = vmatpush2.msra.mxu0 0.0
    %143 = vmatprep.subr.mxu0 0.0
    %144 = vmatpush2.msra.mxu0 0.0
    %145 = vmatprep.subr.mxu0 0.0
    %146 = vmatpush2.msra.mxu0 0.0
    %147 = vmatprep.subr.mxu0 0.0
    %148 = vmatpush2.msra.mxu0 0.0
    %149 = vmatprep.subr.mxu0 0.0
    %150 = vmatpush2.msra.mxu0 0.0
    %151 = vmatprep.subr.mxu0 0.0
    %152 = vmatpush2.msra.mxu0 0.0
    %153 = vmatprep.subr.mxu0 0.0
    %154 = vmatpush2.msra.mxu0 0.0
    %155 = vmatprep.mubr.f32.mxu0 0.0
    %156 = vmatmul.mubr.f32.gmra.mxu0 %v65
    %v157 = vpop.f32.mrf.mxu0
    %v158 = vadd.f32 %v89, %v157
    %v159 = vpop.f32.mrf.mxu0
    %160 = vmatprep.mubr.f32.mxu0 0.0
    %161 = vmatmul.mubr.f32.gmra.mxu0 %v66
    %v162 = vpop.f32.mrf.mxu0
    %v163 = vadd.f32 %v89, %v162
    %v164 = vpop.f32.mrf.mxu0
    %165 = vmatprep.mubr.f32.mxu0 0.0
    %166 = vmatmul.mubr.f32.gmra.mxu0 %v67
    %v167 = vpop.f32.mrf.mxu0
    %v168 = vadd.f32 %v89, %v167
    %v169 = vpop.f32.mrf.mxu0
    %170 = vdwg.mxu0
    %v171 = vmax.f32 %v158, 0.0
    %v172 = vmax.f32 %v163, 0.0
    %v173 = vmax.f32 %v168, 0.0
    %v174 = vld [vmem:[#allocation7] sm:$0xff]
    %v175 = vld [vmem:[#allocation7 + $0x8] sm:$0xff]
    %v176 = vld [vmem:[#allocation7 + $0x10] sm:$0xff]
    %v177 = vld [vmem:[#allocation7 + $0x18] sm:$0xff]
    %v178 = vld [vmem:[#allocation7 + $0x20] sm:$0xff]
    %v179 = vld [vmem:[#allocation7 + $0x28] sm:$0xff]
    %v180 = vld [vmem:[#allocation7 + $0x30] sm:$0xff]
    %v181 = vld [vmem:[#allocation7 + $0x38] sm:$0xff]
    %v182 = vld [vmem:[#allocation7 + $0x40] sm:$0xff]
    %v183 = vld [vmem:[#allocation7 + $0x48] sm:$0xff]
    %v184 = vld [vmem:[#allocation7 + $0x50] sm:$0xff]
    %v185 = vld [vmem:[#allocation7 + $0x58] sm:$0xff]
    %v186 = vld [vmem:[#allocation7 + $0x60] sm:$0xff]
    %v187 = vld [vmem:[#allocation7 + $0x68] sm:$0xff]
    %v188 = vld [vmem:[#allocation7 + $0x70] sm:$0xff]
    %v189 = vld [vmem:[#allocation7 + $0x78] sm:$0xff]
    %v190 = vld [vmem:[%s4] sm:$0x1]
    %v192 = vlaneseq
    %v193 = vshrl.u32 %v192, 7
    %v194 = vsub.s32 0, %v193
    %v195 = vrot.slane %v190, %v194
    %197 = vmatprep.subr.mxu0 0.0
    %198 = vmatpush1.msra.mxu0 %v189
    %199 = vmatprep.subr.mxu0 0.0
    %200 = vmatpush1.msra.mxu0 %v188
    %201 = vmatprep.subr.mxu0 0.0
    %202 = vmatpush1.msra.mxu0 %v187
    %203 = vmatprep.subr.mxu0 0.0
    %204 = vmatpush1.msra.mxu0 %v186
    %205 = vmatprep.subr.mxu0 0.0
    %206 = vmatpush1.msra.mxu0 %v185
    %207 = vmatprep.subr.mxu0 0.0
    %208 = vmatpush1.msra.mxu0 %v184
    %209 = vmatprep.subr.mxu0 0.0
    %210 = vmatpush1.msra.mxu0 %v183
    %211 = vmatprep.subr.mxu0 0.0
    %212 = vmatpush1.msra.mxu0 %v182
    %213 = vmatprep.subr.mxu0 0.0
    %214 = vmatpush1.msra.mxu0 %v181
    %215 = vmatprep.subr.mxu0 0.0
    %216 = vmatpush1.msra.mxu0 %v180
    %217 = vmatprep.subr.mxu0 0.0
    %218 = vmatpush1.msra.mxu0 %v179
    %219 = vmatprep.subr.mxu0 0.0
    %220 = vmatpush1.msra.mxu0 %v178
    %221 = vmatprep.subr.mxu0 0.0
    %222 = vmatpush1.msra.mxu0 %v177
    %223 = vmatprep.subr.mxu0 0.0
    %224 = vmatpush1.msra.mxu0 %v176
    %225 = vmatprep.subr.mxu0 0.0
    %226 = vmatpush1.msra.mxu0 %v175
    %227 = vmatprep.subr.mxu0 0.0
    %228 = vmatpush1.msra.mxu0 %v174
    %229 = vmatprep.subr.mxu0 0.0
    %230 = vmatpush2.msra.mxu0 0.0
    %231 = vmatprep.subr.mxu0 0.0
    %232 = vmatpush2.msra.mxu0 0.0
    %233 = vmatprep.subr.mxu0 0.0
    %234 = vmatpush2.msra.mxu0 0.0
    %235 = vmatprep.subr.mxu0 0.0
    %236 = vmatpush2.msra.mxu0 0.0
    %237 = vmatprep.subr.mxu0 0.0
    %238 = vmatpush2.msra.mxu0 0.0
    %239 = vmatprep.subr.mxu0 0.0
    %240 = vmatpush2.msra.mxu0 0.0
    %241 = vmatprep.subr.mxu0 0.0
    %242 = vmatpush2.msra.mxu0 0.0
    %243 = vmatprep.subr.mxu0 0.0
    %244 = vmatpush2.msra.mxu0 0.0
    %245 = vmatprep.subr.mxu0 0.0
    %246 = vmatpush2.msra.mxu0 0.0
    %247 = vmatprep.subr.mxu0 0.0
    %248 = vmatpush2.msra.mxu0 0.0
    %249 = vmatprep.subr.mxu0 0.0
    %250 = vmatpush2.msra.mxu0 0.0
    %251 = vmatprep.subr.mxu0 0.0
    %252 = vmatpush2.msra.mxu0 0.0
    %253 = vmatprep.subr.mxu0 0.0
    %254 = vmatpush2.msra.mxu0 0.0
    %255 = vmatprep.subr.mxu0 0.0
    %256 = vmatpush2.msra.mxu0 0.0
    %257 = vmatprep.subr.mxu0 0.0
    %258 = vmatpush2.msra.mxu0 0.0
    %259 = vmatprep.subr.mxu0 0.0
    %260 = vmatpush2.msra.mxu0 0.0
    %261 = vmatprep.mubr.f32.mxu0 0.0
    %262 = vmatmul.mubr.f32.gmra.mxu0 %v171
    %v263 = vpop.f32.mrf.mxu0
    %v264 = vadd.f32 %v195, %v263
    %v265 = vpop.f32.mrf.mxu0
    %266 = vmatprep.mubr.f32.mxu0 0.0
    %267 = vmatmul.mubr.f32.gmra.mxu0 %v172
    %v268 = vpop.f32.mrf.mxu0
    %v269 = vadd.f32 %v195, %v268
    %v270 = vpop.f32.mrf.mxu0
    %271 = vmatprep.mubr.f32.mxu0 0.0
    %272 = vmatmul.mubr.f32.gmra.mxu0 %v173
    %v273 = vpop.f32.mrf.mxu0
    %v274 = vadd.f32 %v195, %v273
    %v275 = vpop.f32.mrf.mxu0
    %276 = vdwg.mxu0
    %v277 = vadd.f32 %v264, %v62
    %v278 = vadd.f32 %v269, %v63
    %v279 = vadd.f32 %v274, %v64
    %280 = vst [vmem:[#allocation8] sm:$0xff] %v277
    %281 = vst [vmem:[#allocation8 + $0x8] sm:$0xff] %v278
    %282 = vst [vmem:[#allocation8 + $0x10] sm:$0xff] %v279
    // Predicated region
    $region34: #{tpu_custom_call.1} parent=1 // pred_check
      _
    $region35: #{tpu_custom_call.1} parent=1 // pred_check_branch
      %284 = sbr.rel (0) target = $region37
    $region36: #{tpu_custom_call.1} parent=1 // pred_region
      %s286 = ssub.s32 384, 384
      %287 = vsyncadd [#allocation4], %s286
      %s288 = sshll.u32 [#allocation8], 4
      %s289 = int_to_ptr.vmem [resolvable:$true] %s288
      %294 = dma.vmem_to_hbm [thread:$0]  %s289, 384, %s5, [#allocation4], 128, 128, 8
    $region37: #{tpu_custom_call.1} parent=1 // pred_fallthru
      _
    // Predicated region
    $region38: #{tpu_custom_call.1} parent=1 // pred_check
      _
    $region39: #{tpu_custom_call.1} parent=1 // pred_check_branch
      %296 = sbr.rel (0) target = $region41
    $region40: #{tpu_custom_call.1} parent=1 // pred_region
      %297 = dma.done [#allocation4], 384
    $region41: #{tpu_custom_call.1} parent=1 // pred_fallthru
      _
    %298 = vsyncpa [#allocation3], 1
    %299 = vsyncpa [#allocation6], 1
    %300 = vsyncpa [#allocation4], 1

</llo_original>
